<compile_context>
chip_gen: v7x
topology: tpu7x:2x2x1
jax: 0.10.0
libtpu: 0.0.40
codegen_flags: <defaults>
</compile_context>

<pallas_src>
import functools

import jax
import jax.numpy as jnp
from jax.experimental import pallas as pl
from jax.experimental.pallas import tpu as pltpu


def _pool_identity(dtype):
    """Identity element for max over `dtype` (dtype-aware, per review)."""
    dtype = jnp.dtype(dtype)
    if jnp.issubdtype(dtype, jnp.floating):
        # fp8 (e4m3) has no inf encoding; fall back to the finite minimum.
        return float("-inf") if dtype.itemsize >= 2 else float(jnp.finfo(dtype).min)
    if jnp.issubdtype(dtype, jnp.integer):
        return int(jnp.iinfo(dtype).min)
    raise ValueError(f"unsupported dtype for max pooling: {dtype}")


def _maxpool_same_kernel(x_ref, o_ref, *, h, w, k, neg):
    """k x k (odd k), stride-1, 'same' max pool on a (rows_tile, s_pad) block.

    Each row of the block is an independent flattened (h, w) image plane;
    s_pad >= h*w is the lane-padded spatial extent.
    """
    x = x_ref[...]                                    # (TR, s_pad)
    s_pad = x.shape[-1]
    s_len = h * w
    p = k // 2
    neg = jnp.asarray(neg, dtype=x.dtype)

    # Boundary masks built on a single (1, s_pad) row: the iota / mod /
    # compares cost O(s_pad), not O(rows * s_pad); the select broadcasts
    # them across sublanes (cheap) inside the d-loop.
    pos = jax.lax.broadcasted_iota(jnp.int32, (1, s_pad), 1)
    col = pos % w

    # ---- pass 1: window max along w (shift by +/- d lanes) ----
    y = x
    for d in range(1, p + 1):
        left = pltpu.roll(x, shift=d, axis=1)              # left[s] = x[s - d]
        y = jnp.maximum(y, jnp.where(col >= d, left, neg))
        right = pltpu.roll(x, shift=s_pad - d, axis=1)     # right[s] = x[s + d]
        y = jnp.maximum(y, jnp.where(col < w - d, right, neg))

    # ---- pass 2: window max along h (shift by +/- d*w lanes) ----
    z = y
    for d in range(1, p + 1):
        up = pltpu.roll(y, shift=d * w, axis=1)            # up[s] = y[s - d*w]
        z = jnp.maximum(z, jnp.where(pos >= d * w, up, neg))
        down = pltpu.roll(y, shift=s_pad - d * w, axis=1)  # down[s] = y[s + d*w]
        z = jnp.maximum(z, jnp.where(pos < s_len - d * w, down, neg))

    o_ref[...] = z


def sp_maxpool(x, k=3, s=1):
    """Pallas TPU implementation of SP.forward (MaxPool2d(k, s, padding=k//2))."""
    assert k % 2 == 1, "only odd kernel sizes (same padding) supported"
    assert s == 1, "only stride 1 implemented"
    # TODO(synk): stride != 1 changes the output spatial size and needs a
    # strided gather of window maxima; only the default s=1 is implemented.

    n, c, h, w = x.shape
    rows = n * c
    s_len = h * w
    s_pad = ((s_len + 127) // 128) * 128         # lane-dense (multiple of 128)
    neg = _pool_identity(x.dtype)
    itemsize = jnp.dtype(x.dtype).itemsize

    x2 = x.reshape(rows, s_len)
    if s_pad != s_len:
        # Pad lanes with the pooling identity; padded outputs are sliced off.
        x2 = jnp.pad(x2, ((0, 0), (0, s_pad - s_len)), constant_values=neg)

    # dtype-native sublane tile (sub-32-bit dtypes pack along sublanes).
    sublane = {1: 32, 2: 16}.get(itemsize, 8)

    # Row tile: ~2 MiB per pipeline buffer.  Worst-case pipeline VMEM is
    # 2 specs x 2 buffers x 2 MiB = 8 MiB, plus elementwise temporaries,
    # comfortably under the 32 MiB limit requested below on all chips.
    budget_bytes = 2 * 1024 * 1024
    tr_cap = max(sublane, (budget_bytes // (s_pad * itemsize)) // sublane * sublane)

    if rows <= sublane:
        tr = rows                  # single full-extent block (no divisibility req.)
    else:
        # Aim for >= 2 grid steps so v7x's two TensorCores both get work.
        tr_half = ((pl.cdiv(rows, 2) + sublane - 1) // sublane) * sublane
        tr = min(tr_cap, tr_half)
    grid = (pl.cdiv(rows, tr),)
    # NOTE: a ragged last row-block is safe only because Pallas clips the
    # out-of-bounds part of the writeback; every row is computed
    # independently, so garbage rows read past the end never contaminate
    # valid outputs.  Keep this in mind if block_shape changes.

    kernel = functools.partial(_maxpool_same_kernel, h=h, w=w, k=k, neg=neg)

    out2 = pl.pallas_call(
        kernel,
        out_shape=jax.ShapeDtypeStruct((rows, s_pad), x.dtype),
        grid=grid,
        in_specs=[pl.BlockSpec((tr, s_pad), lambda i: (i, 0))],
        out_specs=pl.BlockSpec((tr, s_pad), lambda i: (i, 0)),
        compiler_params=pltpu.CompilerParams(
            dimension_semantics=("parallel",),
            vmem_limit_bytes=32 * 1024 * 1024),
        cost_estimate=pl.CostEstimate(
            flops=rows * s_len * 8 * (k // 2),
            transcendentals=0,
            bytes_accessed=2 * rows * s_pad * itemsize),
    )(x2)

    if s_pad != s_len:
        out2 = out2[:, :s_len]
    return out2.reshape(n, c, h, w)


def sp_maxpool_ref(x, k=3, s=1):
    """Plain-JAX reference (matches torch.nn.MaxPool2d(k, s, padding=k//2))."""
    pad = k // 2
    return jax.lax.reduce_window(
        x, -jnp.inf, jax.lax.max,
        window_dimensions=(1, 1, k, k),
        window_strides=(1, 1, s, s),
        padding=((0, 0), (0, 0), (pad, pad), (pad, pad)))


if __name__ == "__main__":
    key = jax.random.PRNGKey(0)

    # Main check: small NCHW shapes consistent with the module.
    n, c, h, w = 2, 4, 16, 16
    x = jax.random.normal(key, (n, c, h, w), jnp.float32)
    out = jax.block_until_ready(sp_maxpool(x, k=3, s=1))
    ref = sp_maxpool_ref(x, k=3, s=1)
    assert out.shape == (n, c, h, w)
    assert jnp.allclose(out, ref, rtol=1e-6, atol=1e-6)

    # Secondary check: non-128-multiple spatial extent exercises lane padding.
    x2 = jax.random.normal(jax.random.PRNGKey(1), (1, 3, 10, 10), jnp.float32)
    out2 = jax.block_until_ready(sp_maxpool(x2, k=3, s=1))
    ref2 = sp_maxpool_ref(x2, k=3, s=1)
    assert jnp.allclose(out2, ref2, rtol=1e-6, atol=1e-6)

    print("KERNEL_OK")
</pallas_src>

<mosaic_0001>
module attributes {stable_mosaic.version = 11 : i64} {
  func.func @_maxpool_same_kernel(%arg0: i32, %arg1: memref<8x256xf32, #tpu.memory_space<vmem>>, %arg2: memref<8x256xf32, #tpu.memory_space<vmem>>) attributes {dimension_semantics = [#tpu.dimension_semantics<parallel>], iteration_bounds = array<i64: 1>, scalar_prefetch = 0 : i64, scratch_operands = 0 : i64, tpu.core_type = #tpu.core_type<tc>, window_params = [{transform_indices = @transform_0, window_bounds = array<i64: 8, 256>}, {transform_indices = @transform_1, window_bounds = array<i64: 8, 256>}]} {
    %c0 = arith.constant 0 : index
    %c0_0 = arith.constant 0 : index
    %0 = vector.load %arg1[%c0, %c0_0] : memref<8x256xf32, #tpu.memory_space<vmem>>, vector<8x256xf32>
    %1 = tpu.iota {dimensions = array<i32: 1>} : vector<1x256xi32>
    %c16_i32 = arith.constant 16 : i32
    %c0_i32 = arith.constant 0 : i32
    %2 = arith.cmpi eq, %c16_i32, %c0_i32 : i32
    %c1_i32 = arith.constant 1 : i32
    %3 = arith.select %2, %c1_i32, %c16_i32 : i32
    %4 = vector.broadcast %3 : i32 to vector<1x256xi32>
    %5 = arith.remsi %1, %4 : vector<1x256xi32>
    %c0_i32_1 = arith.constant 0 : i32
    %6 = vector.broadcast %c0_i32_1 : i32 to vector<1x256xi32>
    %7 = arith.cmpi ne, %5, %6 : vector<1x256xi32>
    %c0_i32_2 = arith.constant 0 : i32
    %8 = vector.broadcast %c0_i32_2 : i32 to vector<1x256xi32>
    %9 = arith.cmpi slt, %5, %8 : vector<1x256xi32>
    %c0_i32_3 = arith.constant 0 : i32
    %10 = arith.cmpi slt, %3, %c0_i32_3 : i32
    %11 = vector.broadcast %10 : i1 to vector<1x256xi1>
    %12 = vector.broadcast %11 : vector<1x256xi1> to vector<1x256xi1>
    %13 = arith.xori %9, %12 : vector<1x256xi1>
    %14 = arith.andi %13, %7 : vector<1x256xi1>
    %15 = vector.broadcast %3 : i32 to vector<1x256xi32>
    %16 = arith.addi %5, %15 : vector<1x256xi32>
    %17 = arith.select %14, %16, %5 : vector<1x256xi1>, vector<1x256xi32>
    %c1_i32_4 = arith.constant 1 : i32
    %18 = tpu.dynamic_rotate %0 by %c1_i32_4 dim 1 : vector<8x256xf32>, i32 -> vector<8x256xf32>
    %c1_i32_5 = arith.constant 1 : i32
    %19 = vector.broadcast %c1_i32_5 : i32 to vector<1x256xi32>
    %20 = arith.cmpi sge, %17, %19 : vector<1x256xi32>
    %cst = arith.constant 0xFF800000 : f32
    %21 = vector.shape_cast %20 : vector<1x256xi1> to vector<1x256xi1>
    %22 = vector.broadcast %21 : vector<1x256xi1> to vector<8x256xi1>
    %23 = vector.broadcast %cst : f32 to vector<8x256xf32>
    %24 = arith.select %22, %18, %23 : vector<8x256xi1>, vector<8x256xf32>
    %25 = arith.maximumf %0, %24 : vector<8x256xf32>
    %c255_i32 = arith.constant 255 : i32
    %26 = tpu.dynamic_rotate %0 by %c255_i32 dim 1 : vector<8x256xf32>, i32 -> vector<8x256xf32>
    %c15_i32 = arith.constant 15 : i32
    %27 = vector.broadcast %c15_i32 : i32 to vector<1x256xi32>
    %28 = arith.cmpi slt, %17, %27 : vector<1x256xi32>
    %cst_6 = arith.constant 0xFF800000 : f32
    %29 = vector.shape_cast %28 : vector<1x256xi1> to vector<1x256xi1>
    %30 = vector.broadcast %29 : vector<1x256xi1> to vector<8x256xi1>
    %31 = vector.broadcast %cst_6 : f32 to vector<8x256xf32>
    %32 = arith.select %30, %26, %31 : vector<8x256xi1>, vector<8x256xf32>
    %33 = arith.maximumf %25, %32 : vector<8x256xf32>
    %c16_i32_7 = arith.constant 16 : i32
    %34 = tpu.dynamic_rotate %33 by %c16_i32_7 dim 1 : vector<8x256xf32>, i32 -> vector<8x256xf32>
    %c16_i32_8 = arith.constant 16 : i32
    %35 = vector.broadcast %c16_i32_8 : i32 to vector<1x256xi32>
    %36 = arith.cmpi sge, %1, %35 : vector<1x256xi32>
    %cst_9 = arith.constant 0xFF800000 : f32
    %37 = vector.shape_cast %36 : vector<1x256xi1> to vector<1x256xi1>
    %38 = vector.broadcast %37 : vector<1x256xi1> to vector<8x256xi1>
    %39 = vector.broadcast %cst_9 : f32 to vector<8x256xf32>
    %40 = arith.select %38, %34, %39 : vector<8x256xi1>, vector<8x256xf32>
    %41 = arith.maximumf %33, %40 : vector<8x256xf32>
    %c240_i32 = arith.constant 240 : i32
    %42 = tpu.dynamic_rotate %33 by %c240_i32 dim 1 : vector<8x256xf32>, i32 -> vector<8x256xf32>
    %c240_i32_10 = arith.constant 240 : i32
    %43 = vector.broadcast %c240_i32_10 : i32 to vector<1x256xi32>
    %44 = arith.cmpi slt, %1, %43 : vector<1x256xi32>
    %cst_11 = arith.constant 0xFF800000 : f32
    %45 = vector.shape_cast %44 : vector<1x256xi1> to vector<1x256xi1>
    %46 = vector.broadcast %45 : vector<1x256xi1> to vector<8x256xi1>
    %47 = vector.broadcast %cst_11 : f32 to vector<8x256xf32>
    %48 = arith.select %46, %42, %47 : vector<8x256xi1>, vector<8x256xf32>
    %49 = arith.maximumf %41, %48 : vector<8x256xf32>
    %c0_12 = arith.constant 0 : index
    %c0_13 = arith.constant 0 : index
    %50 = vector.load %arg2[%c0_12, %c0_13] : memref<8x256xf32, #tpu.memory_space<vmem>>, vector<8x256xf32>
    tpu.vector_store %arg2[%c0_12, %c0_13], %49 {strides = array<i32>} : memref<8x256xf32, #tpu.memory_space<vmem>>, vector<8x256xf32>,
    return
  }
  func.func @transform_0(%arg0: i32) -> (i32, i32) {
    %c0_i32 = arith.constant 0 : i32
    %c0_i32_0 = arith.constant 0 : i32
    return %arg0, %c0_i32 : i32, i32
  }
  func.func @transform_1(%arg0: i32) -> (i32, i32) {
    %c0_i32 = arith.constant 0 : i32
    %c0_i32_0 = arith.constant 0 : i32
    return %arg0, %c0_i32 : i32, i32
  }
}

</mosaic_0001>

<llo_original>
// kernel: tpu_custom_call.1
$region0: #{tpu_custom_call.1}
  #allocation0 [shape = 'u32[]', space=smem, size = 0x4, offset = 0x4, fixed_abs, tag = 'smem constant byte address 0x4 - core index']
  #allocation1 [shape = 'u32[144,128]{1,0:T(1,128)}', space=vmem, size = 0x12000, scoped, tag = 'internal scratch']
  %s0 = inlined_call_operand.hbm [shape: f32[8,256], index: 0, kind: input, shape index: {}]
  %s1 = inlined_call_operand.hbm [shape: f32[8,256], index: 1, kind: output, shape index: {}]
  %s2 = sld [smem:[#allocation0]]
  $region18: #{tpu_custom_call.1} parent=0
    _
  %s4 = ssub.s32 1, %s2
  %s5 = scalar_select 0, %s4, %s2
  $region1: #{tpu_custom_call.1} parent=0
    #allocation2 [shape = 'u8[8192]{0}', space=vmem, size = 0x2000, scoped, tag = 'input window, operand 0, single buffered']
    #allocation3 [shape = 's32[1]{0}', space=sflag, size = 0x4, scoped, tag = 'scoped memory for tpu_custom_call.1']
    #allocation4 [shape = 's32[1]{0}', space=sflag, size = 0x4, scoped, tag = 'scoped memory for tpu_custom_call.1']
    #allocation5 [shape = 'u8[8192]{0}', space=vmem, size = 0x2000, scoped, tag = 'output window, operand 0, single buffered']
    %6 = vsyncpa [#allocation3], 0
    %7 = vsyncpa [#allocation4], 0
    // Predicated region
    $region2: #{tpu_custom_call.1} parent=1 // pred_check
      _
    $region3: #{tpu_custom_call.1} parent=1 // pred_check_branch
      %9 = sbr.rel (0) target = $region5
    $region4: #{tpu_custom_call.1} parent=1 // pred_region
      %s11 = ssub.s32 256, 256
      %12 = vsyncadd [#allocation3], %s11
      %s14 = sshll.u32 [#allocation2], 4
      %s15 = int_to_ptr.vmem [resolvable:$true] %s14
      %17 = dma.hbm_to_vmem [thread:$0]  %s0, 256, %s15, [#allocation3]
    $region5: #{tpu_custom_call.1} parent=1 // pred_fallthru
      _
    // Predicated region
    $region6: #{tpu_custom_call.1} parent=1 // pred_check
      _
    $region7: #{tpu_custom_call.1} parent=1 // pred_check_branch
      %19 = sbr.rel (0) target = $region9
    $region8: #{tpu_custom_call.1} parent=1 // pred_region
      %20 = dma.done [#allocation3], 256
    $region9: #{tpu_custom_call.1} parent=1 // pred_fallthru
      _
    %v21 = vld [vmem:[#allocation2] sm:$0xff]
    %v22 = vld [vmem:[#allocation2 + $0x8] sm:$0xff]
    %v23 = vlaneseq
    %v24 = vand.u32 %v23, 127
    %v25 = vadd.s32 %v24, 128
    %vm26 = vcmp.lt.s32.totalorder %v24, 0
    %v27 = vsub.s32 0, %v24
    %v28 = vsel %vm26, %v27, %v24
    %v29 = vshrl.u32 %v28, 4
    %v30 = vand.u32 %v28, 15
    %v31 = vsub.s32 0, %v30
    %v32 = vsel %vm26, %v31, %v30
    %vm33 = vcmp.lt.s32.totalorder %v25, 0
    %v34 = vsub.s32 0, %v25
    %v35 = vsel %vm33, %v34, %v25
    %v36 = vshrl.u32 %v35, 4
    %v37 = vand.u32 %v35, 15
    %v38 = vsub.s32 0, %v37
    %v39 = vsel %vm33, %v38, %v37
    %vm40 = vcmp.ne.s32.totalorder %v32, 0
    %vm41 = vcmp.ne.s32.totalorder %v39, 0
    %vm42 = vcmp.lt.s32.totalorder %v32, 0
    %vm43 = vcmp.lt.s32.totalorder %v39, 0
    %vm44 = vmand %vm42, %vm40
    %vm45 = vmand %vm43, %vm41
    %v46 = vadd.s32 %v32, 16
    %v47 = vadd.s32 %v39, 16
    %v48 = vsel %vm44, %v46, %v32
    %v49 = vsel %vm45, %v47, %v39
    %50 = vrot.lane.b32.xlu0 %v21, 1
    %v51 = vpop.permute.xlu0 %50
    %52 = vrot.lane.b32.xlu0 %v22, 1
    %v53 = vpop.permute.xlu0 %52
    %vm54 = vcmp.lt.s32.totalorder %v24, 1
    %v55 = vsel %vm54, %v51, %v53
    %v56 = vsel %vm54, %v53, %v51
    %vm57 = vcmp.ge.s32.totalorder %v48, 1
    %vm58 = vcmp.ge.s32.totalorder %v49, 1
    %v59 = vsel %vm57, 1, 0
    %v60 = vsel %vm58, 1, 0
    %vm61 = vcmp.eq.s32.totalorder %v59, 1
    %vm62 = vcmp.eq.s32.totalorder %v60, 1
    %v63 = vsel %vm61, %v56, -inf
    %v64 = vsel %vm62, %v55, -inf
    %v65 = vmax.f32 %v21, %v63
    %v66 = vmax.f32 %v22, %v64
    %67 = vrot.lane.b32.xlu0 %v21, 127
    %v68 = vpop.permute.xlu0 %67
    %69 = vrot.lane.b32.xlu0 %v22, 127
    %v70 = vpop.permute.xlu0 %69
    %vm71 = vcmp.lt.s32.totalorder %v24, 127
    %v72 = vsel %vm71, %v68, %v70
    %v73 = vsel %vm71, %v70, %v68
    %vm74 = vcmp.lt.s32.totalorder %v48, 15
    %vm75 = vcmp.lt.s32.totalorder %v49, 15
    %v76 = vsel %vm74, 1, 0
    %v77 = vsel %vm75, 1, 0
    %vm78 = vcmp.eq.s32.totalorder %v76, 1
    %vm79 = vcmp.eq.s32.totalorder %v77, 1
    %v80 = vsel %vm78, %v72, -inf
    %v81 = vsel %vm79, %v73, -inf
    %v82 = vmax.f32 %v65, %v80
    %v83 = vmax.f32 %v66, %v81
    %84 = vrot.lane.b32.xlu0 %v82, 16
    %v85 = vpop.permute.xlu0 %84
    %86 = vrot.lane.b32.xlu0 %v83, 16
    %v87 = vpop.permute.xlu0 %86
    %vm88 = vcmp.lt.s32.totalorder %v24, 16
    %v89 = vsel %vm88, %v85, %v87
    %v90 = vsel %vm88, %v87, %v85
    %vm91 = vcmp.ge.s32.totalorder %v24, 16
    %vm92 = vcmp.ge.s32.totalorder %v25, 16
    %v93 = vsel %vm91, 1, 0
    %v94 = vsel %vm92, 1, 0
    %vm95 = vcmp.eq.s32.totalorder %v93, 1
    %vm96 = vcmp.eq.s32.totalorder %v94, 1
    %v97 = vsel %vm95, %v90, -inf
    %v98 = vsel %vm96, %v89, -inf
    %v99 = vmax.f32 %v82, %v97
    %v100 = vmax.f32 %v83, %v98
    %101 = vrot.lane.b32.xlu0 %v82, 112
    %v102 = vpop.permute.xlu0 %101
    %103 = vrot.lane.b32.xlu0 %v83, 112
    %v104 = vpop.permute.xlu0 %103
    %vm105 = vcmp.lt.s32.totalorder %v24, 112
    %v106 = vsel %vm105, %v102, %v104
    %v107 = vsel %vm105, %v104, %v102
    %vm108 = vcmp.lt.s32.totalorder %v24, 240
    %vm109 = vcmp.lt.s32.totalorder %v25, 240
    %v110 = vsel %vm108, 1, 0
    %v111 = vsel %vm109, 1, 0
    %vm112 = vcmp.eq.s32.totalorder %v110, 1
    %vm113 = vcmp.eq.s32.totalorder %v111, 1
    %v114 = vsel %vm112, %v106, -inf
    %v115 = vsel %vm113, %v107, -inf
    %v116 = vmax.f32 %v99, %v114
    %v117 = vmax.f32 %v100, %v115
    %118 = vst [vmem:[#allocation5] sm:$0xff] %v116
    %119 = vst [vmem:[#allocation5 + $0x8] sm:$0xff] %v117
    // Predicated region
    $region10: #{tpu_custom_call.1} parent=1 // pred_check
      _
    $region11: #{tpu_custom_call.1} parent=1 // pred_check_branch
      %121 = sbr.rel (0) target = $region13
    $region12: #{tpu_custom_call.1} parent=1 // pred_region
      %s123 = ssub.s32 256, 256
      %124 = vsyncadd [#allocation4], %s123
      %s126 = sshll.u32 [#allocation5], 4
      %s127 = int_to_ptr.vmem [resolvable:$true] %s126
      %129 = dma.vmem_to_hbm [thread:$0]  %s127, 256, %s1, [#allocation4]
    $region13: #{tpu_custom_call.1} parent=1 // pred_fallthru
      _
    // Predicated region
    $region14: #{tpu_custom_call.1} parent=1 // pred_check
      _
    $region15: #{tpu_custom_call.1} parent=1 // pred_check_branch
      %131 = sbr.rel (0) target = $region17
    $region16: #{tpu_custom_call.1} parent=1 // pred_region
      %132 = dma.done [#allocation4], 256
    $region17: #{tpu_custom_call.1} parent=1 // pred_fallthru
      _
    %133 = vsyncpa [#allocation3], 1
    %134 = vsyncpa [#allocation4], 1

</llo_original>
